<compile_context>
chip_gen: v6e
topology: v6e:2x2x1
jax: 0.10.0
libtpu: 0.0.40
codegen_flags: <defaults>
</compile_context>

<pallas_src>
import functools

import jax
import jax.numpy as jnp
from jax import lax
from jax.experimental import pallas as pl
from jax.experimental.pallas import tpu as pltpu


def _xlogx(p):
    # x * log(x) with the convention 0 * log(0) == 0 (matches torch.xlogy in F.kl_div).
    safe = jnp.where(p > 0.0, p, 1.0)
    return jnp.where(p > 0.0, p * jnp.log(safe), 0.0)


def _dkd_kernel(gt_ref, t_ref, s_ref, out_ref, *, temperature, alpha, beta, batch_total):
    # gt_ref: (TB, 1) int32, t_ref/s_ref: (TB, C) logits (any float dtype),
    # out_ref: (1, 1) f32 scalar accumulator in SMEM (resident across the grid).
    pid = pl.program_id(0)

    @pl.when(pid == 0)
    def _():
        out_ref[0, 0] = jnp.float32(0.0)

    inv_temp = jnp.float32(1.0 / temperature)
    t = t_ref[...].astype(jnp.float32) * inv_temp
    s = s_ref[...].astype(jnp.float32) * inv_temp
    tb, c = t.shape

    classes = lax.broadcasted_iota(jnp.int32, (tb, c), 1)
    gt_mask = classes == gt_ref[...]                       # (TB, C) one-hot at target class

    # Mask rows belonging to a ragged batch tail (global row index >= true B).
    rows = lax.broadcasted_iota(jnp.int32, (tb, 1), 0) + pid * tb
    row_valid = rows < batch_total                         # (TB, 1) bool

    # --- single exp pass per tensor; everything below reuses e_t / e_s ------------
    m_t = jnp.max(t, axis=1, keepdims=True)
    m_s = jnp.max(s, axis=1, keepdims=True)
    e_t = jnp.exp(t - m_t)
    e_s = jnp.exp(s - m_s)
    sum_t = jnp.sum(e_t, axis=1, keepdims=True)
    sum_s = jnp.sum(e_s, axis=1, keepdims=True)
    e_nt_t = jnp.where(gt_mask, 0.0, e_t)                  # teacher exps, gt lane zeroed
    nt_sum_t = jnp.sum(e_nt_t, axis=1, keepdims=True)
    e_gt_t = sum_t - nt_sum_t
    e_gt_s = jnp.sum(jnp.where(gt_mask, e_s, 0.0), axis=1, keepdims=True)
    nt_sum_s = sum_s - e_gt_s

    log_nt_t = jnp.log(nt_sum_t)                           # per-row scalars only
    log_nt_s = jnp.log(nt_sum_s)

    # --- TCKD: binary (target vs non-target) KL, per-row scalars -------------------
    inv_sum_t = pl.reciprocal(sum_t, approx=False)
    inv_sum_s = pl.reciprocal(sum_s, approx=False)
    pt_t = e_gt_t * inv_sum_t
    pnt_t = nt_sum_t * inv_sum_t
    pt_s = e_gt_s * inv_sum_s
    pnt_s = nt_sum_s * inv_sum_s
    tckd_rows = (_xlogx(pt_t) - pt_t * jnp.log(pt_s)
                 + _xlogx(pnt_t) - pnt_t * jnp.log(pnt_s))  # (TB, 1)

    # --- NCKD: KL over non-target classes, no per-element log ----------------------
    # log t_nc_j = (t_j - m_t) - log(nt_sum_t) on non-target lanes (exact, since
    # e_t = exp(t - m_t)); the gt lane has t_nc == 0 exactly so it contributes 0.
    t_nc = e_nt_t * pl.reciprocal(nt_sum_t, approx=False)
    log_diff = (t - m_t - log_nt_t) - (s - m_s - log_nt_s)  # log t_nc - log s_nc (nt lanes)
    nckd_rows = jnp.sum(t_nc * log_diff, axis=1, keepdims=True)  # (TB, 1)

    per_row = jnp.float32(alpha) * tckd_rows + jnp.float32(beta) * nckd_rows
    per_row = jnp.where(row_valid, per_row, 0.0)
    scale = jnp.float32(temperature * temperature / batch_total)
    out_ref[0, 0] += jnp.sum(per_row) * scale


def dkd_loss(gt, t_score, s_score, *, temperature=1.0, alpha=1.0, beta=8.0,
             block_b=512, vmem_budget_bytes=32 * 1024 * 1024):
    """Pallas implementation of Decoupled_KD.forward. Returns a scalar float32."""
    B, C = t_score.shape
    assert s_score.shape == (B, C) and gt.shape == (B,)

    itemsize = jnp.dtype(t_score.dtype).itemsize
    # VMEM per tile row ~= 2 logit inputs x 2 pipeline buffers (native dtype)
    # plus ~6 f32 (TB, C) temporaries; keep the tile under the budget.
    bytes_per_row = C * (4 * itemsize + 6 * 4) + 16
    tb = max(8, min(block_b, vmem_budget_bytes // max(bytes_per_row, 1)))
    tb = max(8, (tb // 8) * 8)
    if B <= tb:
        tb = B                                  # single full-extent block, no OOB rows
    grid = pl.cdiv(B, tb)                       # ragged last block handled by row mask

    gt_col = gt.reshape(B, 1).astype(jnp.int32)

    kernel = functools.partial(
        _dkd_kernel,
        temperature=float(temperature),
        alpha=float(alpha),
        beta=float(beta),
        batch_total=int(B),
    )

    cost = pl.CostEstimate(
        flops=int(24 * B * C),
        transcendentals=int(2 * B * C),
        bytes_accessed=int(2 * B * C * itemsize + B * 4 + 4),
    )

    out = pl.pallas_call(
        kernel,
        out_shape=jax.ShapeDtypeStruct((1, 1), jnp.float32),
        grid=(grid,),
        in_specs=[
            pl.BlockSpec((tb, 1), lambda i: (i, 0)),   # gt labels (int32 column)
            pl.BlockSpec((tb, C), lambda i: (i, 0)),   # teacher logits (native dtype)
            pl.BlockSpec((tb, C), lambda i: (i, 0)),   # student logits (native dtype)
        ],
        out_specs=pl.BlockSpec(memory_space=pltpu.SMEM),
        compiler_params=pltpu.CompilerParams(
            dimension_semantics=("arbitrary",),        # reduction into resident accumulator
            vmem_limit_bytes=48 * 1024 * 1024,         # above default scoped, < v7x physical
        ),
        cost_estimate=cost,
    )(gt_col, t_score, s_score)
    return out[0, 0]


def _dkd_ref(gt, t_score, s_score, temperature=1.0, alpha=1.0, beta=8.0):
    # Pure-JAX reference mirroring the PyTorch forward.
    t = t_score.astype(jnp.float32) / temperature
    s = s_score.astype(jnp.float32) / temperature
    B, C = t.shape
    mask = jax.nn.one_hot(gt, C, dtype=jnp.bool_)

    t_pred = jax.nn.softmax(t, axis=1)
    s_pred = jax.nn.softmax(s, axis=1)

    def cat_target(p):
        pt = jnp.sum(jnp.where(mask, p, 0.0), axis=1, keepdims=True)
        pnt = jnp.sum(jnp.where(mask, 0.0, p), axis=1, keepdims=True)
        return jnp.concatenate([pt, pnt], axis=1)

    t_tgt = cat_target(t_pred)
    s_tgt = cat_target(s_pred)
    tckd = jnp.sum(t_tgt * (jnp.log(t_tgt) - jnp.log(s_tgt))) / B

    t_m = jnp.where(mask, -1000.0, t)
    s_m = jnp.where(mask, -1000.0, s)
    t_nc = jax.nn.softmax(t_m, axis=1)
    s_lognc = jax.nn.log_softmax(s_m, axis=1)
    kl_el = jnp.where(t_nc > 0,
                      t_nc * (jnp.log(jnp.where(t_nc > 0, t_nc, 1.0)) - s_lognc),
                      0.0)
    nckd = jnp.sum(kl_el) / B
    return (alpha * tckd + beta * nckd) * temperature ** 2


if __name__ == "__main__":
    key = jax.random.PRNGKey(0)
    k1, k2, k3, k4, k5, k6, k7, k8, k9 = jax.random.split(key, 9)

    # Case 1: f32 logits, multi-tile grid that divides evenly (tests tiled accumulation).
    B, C = 16, 128
    gt = jax.random.randint(k1, (B,), 0, C, dtype=jnp.int32)
    t_score = jax.random.normal(k2, (B, C), dtype=jnp.float32)
    s_score = jax.random.normal(k3, (B, C), dtype=jnp.float32)
    loss = jax.block_until_ready(
        dkd_loss(gt, t_score, s_score, temperature=2.0, alpha=1.0, beta=8.0, block_b=8))
    ref = _dkd_ref(gt, t_score, s_score, temperature=2.0, alpha=1.0, beta=8.0)
    assert jnp.allclose(loss, ref, rtol=1e-4, atol=1e-5), (loss, ref)

    # Case 2: bf16 logits streamed natively (no host f32 cast), batch NOT a multiple of the
    # tile -> ragged last block masked in-kernel (no host-side padding copy).
    B2, C2 = 12, 256
    gt2 = jax.random.randint(k4, (B2,), 0, C2, dtype=jnp.int32)
    t2 = jax.random.normal(k5, (B2, C2), dtype=jnp.float32).astype(jnp.bfloat16)
    s2 = jax.random.normal(k6, (B2, C2), dtype=jnp.float32).astype(jnp.bfloat16)
    loss2 = jax.block_until_ready(
        dkd_loss(gt2, t2, s2, temperature=1.0, alpha=1.0, beta=8.0, block_b=8))
    ref2 = _dkd_ref(gt2, t2, s2, temperature=1.0, alpha=1.0, beta=8.0)
    assert jnp.allclose(loss2, ref2, rtol=1e-3, atol=1e-4), (loss2, ref2)

    # Case 3: tiny batch smaller than one tile (single full-extent block, sublane dim = B).
    B3, C3 = 2, 128
    gt3 = jax.random.randint(k7, (B3,), 0, C3, dtype=jnp.int32)
    t3 = jax.random.normal(k8, (B3, C3), dtype=jnp.float32)
    s3 = jax.random.normal(k9, (B3, C3), dtype=jnp.float32)
    loss3 = jax.block_until_ready(
        dkd_loss(gt3, t3, s3, temperature=4.0, alpha=0.5, beta=2.0))
    ref3 = _dkd_ref(gt3, t3, s3, temperature=4.0, alpha=0.5, beta=2.0)
    assert jnp.allclose(loss3, ref3, rtol=1e-4, atol=1e-5), (loss3, ref3)

    print("KERNEL_OK")
</pallas_src>

<mosaic_0001>
module attributes {stable_mosaic.version = 11 : i64} {
  func.func @_dkd_kernel(%arg0: i32, %arg1: memref<8x1xi32, #tpu.memory_space<vmem>>, %arg2: memref<8x128xf32, #tpu.memory_space<vmem>>, %arg3: memref<8x128xf32, #tpu.memory_space<vmem>>, %arg4: memref<1x1xf32, #tpu.memory_space<smem>>) attributes {dimension_semantics = [#tpu.dimension_semantics<arbitrary>], iteration_bounds = array<i64: 2>, scalar_prefetch = 0 : i64, scratch_operands = 0 : i64, tpu.core_type = #tpu.core_type<tc>, window_params = [{transform_indices = @transform_0, window_bounds = array<i64: 8, 1>}, {transform_indices = @transform_1, window_bounds = array<i64: 8, 128>}, {transform_indices = @transform_2, window_bounds = array<i64: 8, 128>}, {transform_indices = @transform_3, window_bounds = array<i64: 1, 1>}]} {
    %c0_i32 = arith.constant 0 : i32
    %0 = arith.cmpi eq, %arg0, %c0_i32 : i32
    %1 = arith.extui %0 : i1 to i32
    %c0_i32_0 = arith.constant 0 : i32
    %2 = arith.cmpi ne, %1, %c0_i32_0 : i32
    scf.if %2 {
      %cst_33 = arith.constant 0.000000e+00 : f32
      %c0_34 = arith.constant 0 : index
      %c0_35 = arith.constant 0 : index
      %108 = memref.load %arg4[%c0_34, %c0_35] : memref<1x1xf32, #tpu.memory_space<smem>>
      memref.store %cst_33, %arg4[%c0_34, %c0_35] : memref<1x1xf32, #tpu.memory_space<smem>>
    } else {
    }
    %c0 = arith.constant 0 : index
    %c0_1 = arith.constant 0 : index
    %3 = vector.load %arg2[%c0, %c0_1] : memref<8x128xf32, #tpu.memory_space<vmem>>, vector<8x128xf32>
    %cst = arith.constant 5.000000e-01 : f32
    %4 = vector.broadcast %cst : f32 to vector<8x128xf32>
    %5 = arith.mulf %3, %4 : vector<8x128xf32>
    %c0_2 = arith.constant 0 : index
    %c0_3 = arith.constant 0 : index
    %6 = vector.load %arg3[%c0_2, %c0_3] : memref<8x128xf32, #tpu.memory_space<vmem>>, vector<8x128xf32>
    %cst_4 = arith.constant 5.000000e-01 : f32
    %7 = vector.broadcast %cst_4 : f32 to vector<8x128xf32>
    %8 = arith.mulf %6, %7 : vector<8x128xf32>
    %9 = tpu.iota {dimensions = array<i32: 1>} : vector<8x128xi32>
    %c0_5 = arith.constant 0 : index
    %c0_6 = arith.constant 0 : index
    %10 = vector.load %arg1[%c0_5, %c0_6] : memref<8x1xi32, #tpu.memory_space<vmem>>, vector<8x1xi32>
    %11 = vector.broadcast %10 : vector<8x1xi32> to vector<8x128xi32>
    %12 = arith.cmpi eq, %9, %11 : vector<8x128xi32>
    %13 = tpu.iota {dimensions = array<i32: 0>} : vector<8x1xi32>
    %c8_i32 = arith.constant 8 : i32
    %14 = arith.muli %arg0, %c8_i32 : i32
    %15 = vector.broadcast %14 : i32 to vector<8x1xi32>
    %16 = arith.addi %13, %15 : vector<8x1xi32>
    %c16_i32 = arith.constant 16 : i32
    %17 = vector.broadcast %c16_i32 : i32 to vector<8x1xi32>
    %18 = arith.cmpi slt, %16, %17 : vector<8x1xi32>
    %cst_7 = arith.constant dense<0xFF800000> : vector<8xf32>
    %19 = vector.multi_reduction <maximumf>, %5, %cst_7 [1] : vector<8x128xf32> to vector<8xf32>
    %20 = vector.shape_cast %19 : vector<8xf32> to vector<8x1xf32>
    %cst_8 = arith.constant dense<0xFF800000> : vector<8xf32>
    %21 = vector.multi_reduction <maximumf>, %8, %cst_8 [1] : vector<8x128xf32> to vector<8xf32>
    %22 = vector.shape_cast %21 : vector<8xf32> to vector<8x1xf32>
    %23 = vector.broadcast %20 : vector<8x1xf32> to vector<8x128xf32>
    %24 = arith.subf %5, %23 : vector<8x128xf32>
    %25 = math.exp %24 : vector<8x128xf32>
    %26 = vector.broadcast %22 : vector<8x1xf32> to vector<8x128xf32>
    %27 = arith.subf %8, %26 : vector<8x128xf32>
    %28 = math.exp %27 : vector<8x128xf32>
    %cst_9 = arith.constant dense<0.000000e+00> : vector<8xf32>
    %29 = vector.multi_reduction <add>, %25, %cst_9 [1] : vector<8x128xf32> to vector<8xf32>
    %30 = vector.shape_cast %29 : vector<8xf32> to vector<8x1xf32>
    %cst_10 = arith.constant dense<0.000000e+00> : vector<8xf32>
    %31 = vector.multi_reduction <add>, %28, %cst_10 [1] : vector<8x128xf32> to vector<8xf32>
    %32 = vector.shape_cast %31 : vector<8xf32> to vector<8x1xf32>
    %cst_11 = arith.constant 0.000000e+00 : f32
    %33 = vector.broadcast %cst_11 : f32 to vector<8x128xf32>
    %34 = arith.select %12, %33, %25 : vector<8x128xi1>, vector<8x128xf32>
    %cst_12 = arith.constant dense<0.000000e+00> : vector<8xf32>
    %35 = vector.multi_reduction <add>, %34, %cst_12 [1] : vector<8x128xf32> to vector<8xf32>
    %36 = vector.shape_cast %35 : vector<8xf32> to vector<8x1xf32>
    %37 = arith.subf %30, %36 : vector<8x1xf32>
    %cst_13 = arith.constant 0.000000e+00 : f32
    %38 = vector.broadcast %cst_13 : f32 to vector<8x128xf32>
    %39 = arith.select %12, %28, %38 : vector<8x128xi1>, vector<8x128xf32>
    %cst_14 = arith.constant dense<0.000000e+00> : vector<8xf32>
    %40 = vector.multi_reduction <add>, %39, %cst_14 [1] : vector<8x128xf32> to vector<8xf32>
    %41 = vector.shape_cast %40 : vector<8xf32> to vector<8x1xf32>
    %42 = arith.subf %32, %41 : vector<8x1xf32>
    %43 = math.log %36 : vector<8x1xf32>
    %44 = math.log %42 : vector<8x1xf32>
    %45 = tpu.reciprocal %30 : vector<8x1xf32> -> vector<8x1xf32>
    %46 = tpu.reciprocal %32 : vector<8x1xf32> -> vector<8x1xf32>
    %47 = arith.mulf %37, %45 : vector<8x1xf32>
    %48 = arith.mulf %36, %45 : vector<8x1xf32>
    %49 = arith.mulf %41, %46 : vector<8x1xf32>
    %50 = arith.mulf %42, %46 : vector<8x1xf32>
    %cst_15 = arith.constant 0.000000e+00 : f32
    %51 = vector.broadcast %cst_15 : f32 to vector<8x1xf32>
    %52 = arith.cmpf ogt, %47, %51 : vector<8x1xf32>
    %cst_16 = arith.constant 1.000000e+00 : f32
    %53 = vector.broadcast %cst_16 : f32 to vector<8x1xf32>
    %54 = arith.select %52, %47, %53 : vector<8x1xi1>, vector<8x1xf32>
    %cst_17 = arith.constant 0.000000e+00 : f32
    %55 = vector.broadcast %cst_17 : f32 to vector<8x1xf32>
    %56 = arith.cmpf ogt, %47, %55 : vector<8x1xf32>
    %57 = math.log %54 : vector<8x1xf32>
    %58 = arith.mulf %47, %57 : vector<8x1xf32>
    %cst_18 = arith.constant 0.000000e+00 : f32
    %59 = vector.broadcast %cst_18 : f32 to vector<8x1xf32>
    %60 = arith.select %56, %58, %59 : vector<8x1xi1>, vector<8x1xf32>
    %61 = math.log %49 : vector<8x1xf32>
    %62 = arith.mulf %47, %61 : vector<8x1xf32>
    %63 = arith.subf %60, %62 : vector<8x1xf32>
    %cst_19 = arith.constant 0.000000e+00 : f32
    %64 = vector.broadcast %cst_19 : f32 to vector<8x1xf32>
    %65 = arith.cmpf ogt, %48, %64 : vector<8x1xf32>
    %cst_20 = arith.constant 1.000000e+00 : f32
    %66 = vector.broadcast %cst_20 : f32 to vector<8x1xf32>
    %67 = arith.select %65, %48, %66 : vector<8x1xi1>, vector<8x1xf32>
    %cst_21 = arith.constant 0.000000e+00 : f32
    %68 = vector.broadcast %cst_21 : f32 to vector<8x1xf32>
    %69 = arith.cmpf ogt, %48, %68 : vector<8x1xf32>
    %70 = math.log %67 : vector<8x1xf32>
    %71 = arith.mulf %48, %70 : vector<8x1xf32>
    %cst_22 = arith.constant 0.000000e+00 : f32
    %72 = vector.broadcast %cst_22 : f32 to vector<8x1xf32>
    %73 = arith.select %69, %71, %72 : vector<8x1xi1>, vector<8x1xf32>
    %74 = arith.addf %63, %73 : vector<8x1xf32>
    %75 = math.log %50 : vector<8x1xf32>
    %76 = arith.mulf %48, %75 : vector<8x1xf32>
    %77 = arith.subf %74, %76 : vector<8x1xf32>
    %78 = tpu.reciprocal %36 : vector<8x1xf32> -> vector<8x1xf32>
    %79 = vector.broadcast %78 : vector<8x1xf32> to vector<8x128xf32>
    %80 = arith.mulf %34, %79 : vector<8x128xf32>
    %81 = vector.broadcast %20 : vector<8x1xf32> to vector<8x128xf32>
    %82 = arith.subf %5, %81 : vector<8x128xf32>
    %83 = vector.broadcast %43 : vector<8x1xf32> to vector<8x128xf32>
    %84 = arith.subf %82, %83 : vector<8x128xf32>
    %85 = vector.broadcast %22 : vector<8x1xf32> to vector<8x128xf32>
    %86 = arith.subf %8, %85 : vector<8x128xf32>
    %87 = vector.broadcast %44 : vector<8x1xf32> to vector<8x128xf32>
    %88 = arith.subf %86, %87 : vector<8x128xf32>
    %89 = arith.subf %84, %88 : vector<8x128xf32>
    %90 = arith.mulf %80, %89 : vector<8x128xf32>
    %cst_23 = arith.constant dense<0.000000e+00> : vector<8xf32>
    %91 = vector.multi_reduction <add>, %90, %cst_23 [1] : vector<8x128xf32> to vector<8xf32>
    %92 = vector.shape_cast %91 : vector<8xf32> to vector<8x1xf32>
    %cst_24 = arith.constant 1.000000e+00 : f32
    %93 = vector.broadcast %cst_24 : f32 to vector<8x1xf32>
    %94 = arith.mulf %93, %77 : vector<8x1xf32>
    %cst_25 = arith.constant 8.000000e+00 : f32
    %95 = vector.broadcast %cst_25 : f32 to vector<8x1xf32>
    %96 = arith.mulf %95, %92 : vector<8x1xf32>
    %97 = arith.addf %94, %96 : vector<8x1xf32>
    %cst_26 = arith.constant 0.000000e+00 : f32
    %98 = vector.broadcast %cst_26 : f32 to vector<8x1xf32>
    %99 = arith.select %18, %97, %98 : vector<8x1xi1>, vector<8x1xf32>
    %c0_27 = arith.constant 0 : index
    %c0_28 = arith.constant 0 : index
    %100 = memref.load %arg4[%c0_27, %c0_28] : memref<1x1xf32, #tpu.memory_space<smem>>
    %101 = vector.shape_cast %99 : vector<8x1xf32> to vector<1x8x1xf32>
    %cst_29 = arith.constant dense<0.000000e+00> : vector<1xf32>
    %102 = vector.multi_reduction <add>, %101, %cst_29 [1, 2] : vector<1x8x1xf32> to vector<1xf32>
    %103 = vector.shape_cast %102 : vector<1xf32> to vector<1x1x1xf32>
    %104 = vector.extract %103[0, 0, 0] : f32 from vector<1x1x1xf32>
    %cst_30 = arith.constant 2.500000e-01 : f32
    %105 = arith.mulf %104, %cst_30 : f32
    %106 = arith.addf %100, %105 : f32
    %c0_31 = arith.constant 0 : index
    %c0_32 = arith.constant 0 : index
    %107 = memref.load %arg4[%c0_31, %c0_32] : memref<1x1xf32, #tpu.memory_space<smem>>
    memref.store %106, %arg4[%c0_31, %c0_32] : memref<1x1xf32, #tpu.memory_space<smem>>
    return
  }
  func.func @transform_0(%arg0: i32) -> (i32, i32) {
    %c0_i32 = arith.constant 0 : i32
    %c0_i32_0 = arith.constant 0 : i32
    return %arg0, %c0_i32 : i32, i32
  }
  func.func @transform_1(%arg0: i32) -> (i32, i32) {
    %c0_i32 = arith.constant 0 : i32
    %c0_i32_0 = arith.constant 0 : i32
    return %arg0, %c0_i32 : i32, i32
  }
  func.func @transform_2(%arg0: i32) -> (i32, i32) {
    %c0_i32 = arith.constant 0 : i32
    %c0_i32_0 = arith.constant 0 : i32
    return %arg0, %c0_i32 : i32, i32
  }
  func.func @transform_3(%arg0: i32) -> (i32, i32) {
    %c0_i32 = arith.constant 0 : i32
    %c0_i32_0 = arith.constant 0 : i32
    %c0_i32_1 = arith.constant 0 : i32
    return %c0_i32, %c0_i32_0 : i32, i32
  }
}

</mosaic_0001>

<llo_original>
// kernel: tpu_custom_call.1
$region0: #{tpu_custom_call.1}
  #allocation0 [shape = 'u32[]', space=smem, size = 0x4, offset = 0x4, fixed_abs, tag = 'smem constant byte address 0x4 - core index']
  #allocation1 [shape = 'u32[144,128]{1,0:T(1,128)}', space=vmem, size = 0x12000, scoped, tag = 'internal scratch']
  %s0 = inlined_call_operand.vmem [shape: s32[16,1], index: 0, kind: input, shape index: {}]
  %s1 = inlined_call_operand.vmem [shape: f32[16,128], index: 1, kind: input, shape index: {}]
  %s2 = inlined_call_operand.hbm [shape: f32[16,128], index: 2, kind: input, shape index: {}]
  %s3 = inlined_call_operand.hbm [shape: f32[1,1], index: 3, kind: output, shape index: {}]
  %s4 = sld [smem:[#allocation0]]
  $region53: #{tpu_custom_call.1} parent=0
    _
  %s6 = ssub.s32 1, %s4
  %s7 = scalar_select 0, %s6, %s4
  $region1: #{tpu_custom_call.1} parent=0
    #allocation2 [shape = 'u8[8192]{0}', space=vmem, size = 0x2000, scoped, tag = 'input window, operand 2']
    #allocation3 [shape = 's32[2]{0}', space=sflag, size = 0x8, scoped, tag = 'scoped memory for tpu_custom_call.1']
    #allocation4 [shape = 's32[2]{0}', space=sflag, size = 0x8, scoped, tag = 'scoped memory for tpu_custom_call.1']
    #allocation5 [shape = 'u8[512]{0}', space=smem, size = 0x200, scoped, tag = 'output window, operand 0, single buffered']
    %8 = vsyncpa [#allocation3], 0
    %s9 = scalar_lea.sflag [#allocation3], 1
    %10 = vsyncpa %s9, 0
    %11 = vsyncpa [#allocation4], 0
    loop: start=0, step=1, limit=4
    $region2: #{tpu_custom_call.1} parent=1 // loop_pre_header
      _
    $region3: #{tpu_custom_call.1} parent=1 // loop_header
      %s13 = sphi 0, %s17
      %p14 = scmp.ge.s32.totalorder %s13, 4
      %s23 = sphi 0, %s25
      %s26 = sphi 0, %s23
      %s27 = sphi 0, %s26
      %s43 = sphi 0, %s27
      %s49 = sphi 0, %s51
      %s52 = sphi 0, %s49
      %s53 = sphi 0, %s52
      %s69 = sphi 0, %s53
      %s75 = sphi 0, %s77
      %s78 = sphi 0, %s75
      %s79 = sphi 0, %s78
      %s95 = sphi 0, %s79
      %s99 = sphi 0, %s99
      %s101 = sphi 0, %s99
      %s102 = sphi 0, %s101
      %s116 = sphi 0, %s102
    $region4: #{tpu_custom_call.1} parent=1 // loop_header_branch
      %16 = sbr.rel (%p14) target = $region8
    $region5: #{tpu_custom_call.1} parent=1 // loop_body
      %s18 = ssub.s32 %s13, 1
      %s19 = ssub.s32 %s13, 2
      %s20 = sadd.s32 %s13, 1
      %s21 = ssub.s32 %s13, %s20
      %p22 = scmp.eq.s32.totalorder %s21, 0
      %s24 = sadd.s32 %s23, 1
      %s25 = scalar_select %p22, %s23, %s24
      %p28 = pneg %p22
      %p29 = scmp.eq.s32.totalorder %s13, 1
      %p30 = por %p28, %p29
      %p31 = scmp.ne.s32.totalorder %s23, %s26
      %p32 = scmp.eq.s32.totalorder %s13, 0
      %p33 = por %p31, %p32
      %p34 = scmp.ne.s32.totalorder %s23, %s26
      %p35 = scmp.eq.s32.totalorder %s18, 1
      %p36 = por %p34, %p35
      %p37 = scmp.ne.s32.totalorder %s26, %s27
      %p38 = scmp.eq.s32.totalorder %s18, 0
      %p39 = por %p37, %p38
      %p40 = scmp.ne.s32.totalorder %s26, %s27
      %p41 = scmp.eq.s32.totalorder %s19, 1
      %p42 = por %p40, %p41
      %p44 = scmp.ne.s32.totalorder %s27, %s43
      %p45 = scmp.eq.s32.totalorder %s19, 0
      %p46 = por %p44, %p45
      %s47 = ssub.s32 %s13, %s20
      %p48 = scmp.eq.s32.totalorder %s47, 0
      %s50 = sadd.s32 %s49, 1
      %s51 = scalar_select %p48, %s49, %s50
      %p54 = pneg %p48
      %p55 = scmp.eq.s32.totalorder %s13, 1
      %p56 = por %p54, %p55
      %p57 = scmp.ne.s32.totalorder %s49, %s52
      %p58 = scmp.eq.s32.totalorder %s13, 0
      %p59 = por %p57, %p58
      %p60 = scmp.ne.s32.totalorder %s49, %s52
      %p61 = scmp.eq.s32.totalorder %s18, 1
      %p62 = por %p60, %p61
      %p63 = scmp.ne.s32.totalorder %s52, %s53
      %p64 = scmp.eq.s32.totalorder %s18, 0
      %p65 = por %p63, %p64
      %p66 = scmp.ne.s32.totalorder %s52, %s53
      %p67 = scmp.eq.s32.totalorder %s19, 1
      %p68 = por %p66, %p67
      %p70 = scmp.ne.s32.totalorder %s53, %s69
      %p71 = scmp.eq.s32.totalorder %s19, 0
      %p72 = por %p70, %p71
      %s73 = ssub.s32 %s13, %s20
      %p74 = scmp.eq.s32.totalorder %s73, 0
      %s76 = sadd.s32 %s75, 1
      %s77 = scalar_select %p74, %s75, %s76
      %p80 = pneg %p74
      %p81 = scmp.eq.s32.totalorder %s13, 1
      %p82 = por %p80, %p81
      %p83 = scmp.ne.s32.totalorder %s75, %s78
      %p84 = scmp.eq.s32.totalorder %s13, 0
      %p85 = por %p83, %p84
      %p86 = scmp.ne.s32.totalorder %s75, %s78
      %p87 = scmp.eq.s32.totalorder %s18, 1
      %p88 = por %p86, %p87
      %p89 = scmp.ne.s32.totalorder %s78, %s79
      %p90 = scmp.eq.s32.totalorder %s18, 0
      %p91 = por %p89, %p90
      %p92 = scmp.ne.s32.totalorder %s78, %s79
      %p93 = scmp.eq.s32.totalorder %s19, 1
      %p94 = por %p92, %p93
      %p96 = scmp.ne.s32.totalorder %s79, %s95
      %p97 = scmp.eq.s32.totalorder %s19, 0
      %p98 = por %p96, %p97
      %s100 = sadd.s32 %s99, 1
      %p103 = scmp.eq.s32.totalorder %s13, 1
      %p104 = scmp.ne.s32.totalorder %s99, %s101
      %p105 = scmp.eq.s32.totalorder %s13, 0
      %p106 = por %p104, %p105
      %p107 = scmp.ne.s32.totalorder %s99, %s101
      %p108 = scmp.eq.s32.totalorder %s18, 1
      %p109 = por %p107, %p108
      %p110 = scmp.ne.s32.totalorder %s101, %s102
      %p111 = scmp.eq.s32.totalorder %s18, 0
      %p112 = por %p110, %p111
      %p113 = scmp.ne.s32.totalorder %s101, %s102
      %p114 = scmp.eq.s32.totalorder %s19, 1
      %p115 = por %p113, %p114
      %p117 = scmp.ne.s32.totalorder %s102, %s116
      %p118 = scmp.eq.s32.totalorder %s19, 0
      %p119 = por %p117, %p118
      %p120 = scmp.le.s32.totalorder 1, %s13
      %p121 = scmp.lt.s32.totalorder %s13, 3
      %p122 = pnand %p120, %p121
      %p123 = pneg %p122
      // Predicated region
      $region9: #{tpu_custom_call.1} parent=5 // pred_check
        _
      $region10: #{tpu_custom_call.1} parent=5 // pred_check_branch
        %125 = sbr.rel (%p122) target = $region12
      $region11: #{tpu_custom_call.1} parent=5 // pred_region
        %s126 = ssub.s32 %s13, 1
      $region12: #{tpu_custom_call.1} parent=5 // pred_fallthru
        _
      %p127 = scmp.lt.s32.totalorder %s13, 2
      // Predicated region
      $region13: #{tpu_custom_call.1} parent=5 // pred_check
        %p128 = pneg %p127
      $region14: #{tpu_custom_call.1} parent=5 // pred_check_branch
        %130 = sbr.rel (%p128) target = $region16
      $region15: #{tpu_custom_call.1} parent=5 // pred_region
        // Predicated region
        $region17: #{tpu_custom_call.1} parent=15 // pred_check
          %p131 = pneg %p33
        $region18: #{tpu_custom_call.1} parent=15 // pred_check_branch
          %133 = sbr.rel (%p131) target = $region20
        $region19: #{tpu_custom_call.1} parent=15 // pred_region
          %p134 = scmp.lt.s32.totalorder %s13, 1
          %s135 = scalar_select %p134, %s13, 1
          %s136 = smul.addr %s135, 8
          %s137 = scalar_lea.vmem %s0, %s136
        $region20: #{tpu_custom_call.1} parent=15 // pred_fallthru
          _
        // Predicated region
        $region21: #{tpu_custom_call.1} parent=15 // pred_check
          %p138 = pneg %p59
        $region22: #{tpu_custom_call.1} parent=15 // pred_check_branch
          %140 = sbr.rel (%p138) target = $region24
        $region23: #{tpu_custom_call.1} parent=15 // pred_region
          %p141 = scmp.lt.s32.totalorder %s13, 1
          %s142 = scalar_select %p141, %s13, 1
          %s143 = smul.addr %s142, 8
          %s144 = scalar_lea.vmem %s1, %s143
        $region24: #{tpu_custom_call.1} parent=15 // pred_fallthru
          _
        // Predicated region
        $region25: #{tpu_custom_call.1} parent=15 // pred_check
          %p145 = pneg %p85
        $region26: #{tpu_custom_call.1} parent=15 // pred_check_branch
          %147 = sbr.rel (%p145) target = $region28
        $region27: #{tpu_custom_call.1} parent=15 // pred_region
          %s148 = sand.u32 %s75, 1
          %s149 = scalar_lea.sflag [#allocation3], %s148
          %s150 = sand.u32 %s75, 1
          %s151 = smul.addr %s150, 8
          %s152 = scalar_lea.vmem [#allocation2], %s151
          %s154 = ssub.s32 128, 128
          %155 = vsyncadd %s149, %s154
          %s156 = smul.addr %s13, 128
          %s157 = scalar_lea.hbm %s2, %s156
          %s159 = sshll.u32 %s152, 4
          %s160 = int_to_ptr.vmem [resolvable:$true] %s159
          %162 = dma.hbm_to_vmem [thread:$0]  %s157, 128, %s160, %s149
        $region28: #{tpu_custom_call.1} parent=15 // pred_fallthru
          _
      $region16: #{tpu_custom_call.1} parent=5 // pred_fallthru
        _
      %p163 = scmp.le.s32.totalorder 1, %s13
      %p164 = scmp.lt.s32.totalorder %s13, 3
      %p165 = pnand %p163, %p164
      %p166 = pneg %p165
      // Predicated region
      $region29: #{tpu_custom_call.1} parent=5 // pred_check
        _
      $region30: #{tpu_custom_call.1} parent=5 // pred_check_branch
        %168 = sbr.rel (%p165) target = $region32
      $region31: #{tpu_custom_call.1} parent=5 // pred_region
        %s169 = ssub.s32 %s13, 1
        %s170 = sand.u32 %s78, 1
        %s171 = scalar_lea.sflag [#allocation3], %s170
        %s172 = sand.u32 %s78, 1
        %s173 = smul.addr %s172, 8
        %s174 = scalar_lea.vmem [#allocation2], %s173
        // Predicated region
        $region33: #{tpu_custom_call.1} parent=31 // pred_check
          %p175 = pneg %p91
        $region34: #{tpu_custom_call.1} parent=31 // pred_check_branch
          %177 = sbr.rel (%p175) target = $region36
        $region35: #{tpu_custom_call.1} parent=31 // pred_region
          %178 = dma.done %s171, 128
        $region36: #{tpu_custom_call.1} parent=31 // pred_fallthru
          _
        %p179 = scmp.lt.s32.totalorder %s18, 1
        %s180 = scalar_select %p179, %s18, 1
        %s181 = smul.addr %s180, 8
        %s182 = scalar_lea.vmem %s0, %s181
        %p183 = pneg %p39
        %p184 = pneg %p36
        %p185 = scmp.lt.s32.totalorder %s18, 1
        %s186 = scalar_select %p185, %s18, 1
        %s187 = smul.addr %s186, 8
        %s188 = scalar_lea.vmem %s1, %s187
        %p189 = pneg %p65
        %p190 = pneg %p62
        %s191 = sand.u32 %s78, 1
        %s192 = scalar_lea.sflag [#allocation3], %s191
        %s193 = sand.u32 %s78, 1
        %s194 = smul.addr %s193, 8
        %s195 = scalar_lea.vmem [#allocation2], %s194
        %p196 = pneg %p91
        %p197 = pneg %p88
        %p198 = pneg %p112
        %p199 = pneg %p109
        %p200 = scmp.lt.s32.totalorder %s18, 1
        %s201 = scalar_select %p200, %s18, 1
        %s202 = smul.addr %s201, 8
        %s203 = scalar_lea.vmem %s0, %s202
        %p204 = scmp.lt.s32.totalorder %s18, 1
        %s205 = scalar_select %p204, %s18, 1
        %s206 = smul.addr %s205, 8
        %s207 = scalar_lea.vmem %s1, %s206
        %p208 = scmp.eq.s32.totalorder %s18, 0
        // Predicated region
        $region37: #{tpu_custom_call.1} parent=31 // pred_check
          %p209 = pneg %p208
        $region38: #{tpu_custom_call.1} parent=31 // pred_check_branch
          %211 = sbr.rel (%p209) target = $region40
        $region39: #{tpu_custom_call.1} parent=31 // pred_region
          %s212 = scalar_lea.smem [#allocation5], 0
          %213 = sst [smem:[%s212]] 0.0
        $region40: #{tpu_custom_call.1} parent=31 // pred_fallthru
          _
        %v214 = vld [vmem:[%s207] sm:$0xff]
        %v215 = vmul.f32 %v214, 0.5
        %v216 = vld [vmem:[%s174] sm:$0xff]
        %v217 = vmul.f32 %v216, 0.5
        %v218 = vlaneseq
        %v219 = vand.u32 %v218, 127
        %v220 = vld [vmem:[%s203] sm:$0xff]
        %221 = vset.pattern.permute.xlu0 0
        %222 = vperm.xlu0 %221, %v220
        %v223 = vpop.permute.xlu0 %222
        %vm224 = vcmp.eq.s32.totalorder %v219, %v223
        %v225 = vlaneseq
        %v226 = vshrl.u32 %v225, 7
        %s227 = smul.u32 %s18, 8
        %v228 = vstv %s227
        %v229 = vadd.s32 %v226, %v228
        %vm230 = vcmp.lt.s32.totalorder %v229, 16
        %231 = vmax.xlane.f32.xlu0 %v215
        %v232 = vpop.xlane.xlu0 %231
        %233 = vmax.xlane.f32.xlu0 %v217
        %v234 = vpop.xlane.xlu0 %233
        %v235 = vsub.f32 %v215, %v232
        %v236 = vmul.f32 %v235, 1.442695
        %v237 = vpow.pop %v236
        %v238 = vsub.f32 %v217, %v234
        %v239 = vmul.f32 %v238, 1.442695
        %v240 = vpow.pop %v239
        %241 = vadd.xlane.f32.xlu0 %v237
        %v242 = vpop.xlane.xlu0 %241
        %243 = vadd.xlane.f32.xlu0 %v240
        %v244 = vpop.xlane.xlu0 %243
        %v245 = vsel %vm224, 0.0, %v237
        %246 = vadd.xlane.f32.xlu0 %v245
        %v247 = vpop.xlane.xlu0 %246
        %v248 = vsub.f32 %v242, %v247
        %v249 = vsel %vm224, %v240, 0.0
        %250 = vadd.xlane.f32.xlu0 %v249
        %v251 = vpop.xlane.xlu0 %250
        %v252 = vsub.f32 %v244, %v251
        %v253 = vlog2.pop %v247
        %v254 = vmul.f32 %v253, 0.6931472
        %v255 = vlog2.pop %v252
        %v256 = vmul.f32 %v255, 0.6931472
        %v257 = vrcp.pop %v242
        %v258 = vrcp.pop %v244
        %v259 = vmul.f32 %v248, %v257
        %v260 = vmul.f32 %v247, %v257
        %v261 = vmul.f32 %v251, %v258
        %v262 = vmul.f32 %v252, %v258
        %vm263 = vcmp.gt.f32.partialorder %v259, 0.0
        %v264 = vsel %vm263, %v259, 1.0
        %v265 = vlog2.pop %v264
        %v266 = vmul.f32 %v265, 0.6931472
        %v267 = vmul.f32 %v259, %v266
        %v268 = vsel %vm263, %v267, 0.0
        %v269 = vlog2.pop %v261
        %v270 = vmul.f32 %v269, 0.6931472
        %v271 = vmul.f32 %v259, %v270
        %v272 = vsub.f32 %v268, %v271
        %vm273 = vcmp.gt.f32.partialorder %v260, 0.0
        %v274 = vsel %vm273, %v260, 1.0
        %v275 = vlog2.pop %v274
        %v276 = vmul.f32 %v275, 0.6931472
        %v277 = vmul.f32 %v260, %v276
        %v278 = vsel %vm273, %v277, 0.0
        %v279 = vadd.f32 %v272, %v278
        %v280 = vlog2.pop %v262
        %v281 = vmul.f32 %v280, 0.6931472
        %v282 = vmul.f32 %v260, %v281
        %v283 = vsub.f32 %v279, %v282
        %v284 = vrcp.pop %v247
        %v285 = vmul.f32 %v245, %v284
        %v286 = vsub.f32 %v235, %v254
        %v287 = vsub.f32 %v238, %v256
        %v288 = vsub.f32 %v286, %v287
        %v289 = vmul.f32 %v285, %v288
        %290 = vadd.xlane.f32.xlu0 %v289
        %v291 = vpop.xlane.xlu0 %290
        %v292 = vmul.f32 %v291, 8.0
        %v293 = vadd.f32 %v283, %v292
        %v294 = vsel %vm230, %v293, 0.0
        %s295 = sld [smem:[#allocation5]]
        %vm296 = vcmask 7168
        %v297 = vsel %vm296, %v294, 0.0
        %298 = vadd.xlane.f32.xlu0 %v297
        %v299 = vpop.xlane.xlu0 %298
        %v300 = vrot.slane %v299, 4
        %v301 = vadd.f32 %v299, %v300
        %v302 = vrot.slane %v301, 2
        %v303 = vadd.f32 %v301, %v302
        %v304 = vrot.slane %v303, 1
        %v305 = vadd.f32 %v303, %v304
        %s306 = vtos %v305
        %s307 = smul.f32 %s306, 0.25
        %s308 = sadd.f32 %s295, %s307
        %s309 = scalar_lea.smem [#allocation5], 0
        %310 = sst [smem:[%s309]] %s308
        // Predicated region
        $region41: #{tpu_custom_call.1} parent=31 // pred_check
          %p311 = pneg %p109
        $region42: #{tpu_custom_call.1} parent=31 // pred_check_branch
          %313 = sbr.rel (%p311) target = $region44
        $region43: #{tpu_custom_call.1} parent=31 // pred_region
          %s315 = ssub.s32 16, 16
          %316 = vsyncadd [#allocation4], %s315
          %319 = dma.smem_to_hbm [#allocation5], 16, %s3, [#allocation4]
        $region44: #{tpu_custom_call.1} parent=31 // pred_fallthru
          _
        // Predicated region
        $region45: #{tpu_custom_call.1} parent=31 // pred_check
          %p320 = pneg %p109
        $region46: #{tpu_custom_call.1} parent=31 // pred_check_branch
          %322 = sbr.rel (%p320) target = $region48
        $region47: #{tpu_custom_call.1} parent=31 // pred_region
          %323 = dma.done [#allocation4], 16
        $region48: #{tpu_custom_call.1} parent=31 // pred_fallthru
          _
        %324 = sfence
      $region32: #{tpu_custom_call.1} parent=5 // pred_fallthru
        _
      %p325 = scmp.le.s32.totalorder 2, %s13
      // Predicated region
      $region49: #{tpu_custom_call.1} parent=5 // pred_check
        %p326 = pneg %p325
      $region50: #{tpu_custom_call.1} parent=5 // pred_check_branch
        %328 = sbr.rel (%p326) target = $region52
      $region51: #{tpu_custom_call.1} parent=5 // pred_region
        %s329 = ssub.s32 %s13, 2
      $region52: #{tpu_custom_call.1} parent=5 // pred_fallthru
        _
    $region6: #{tpu_custom_call.1} parent=1 // loop_footer
      %s17 = sadd.s32 1, %s13
    $region7: #{tpu_custom_call.1} parent=1 // loop_footer_branch
      %12 = sbr.rel target = $region3
    $region8: #{tpu_custom_call.1} parent=1 // loop_exit
      _
    %330 = vsyncpa [#allocation3], 1
    %s331 = scalar_lea.sflag [#allocation3], 1
    %332 = vsyncpa %s331, 1
    %333 = vsyncpa [#allocation4], 1
    %s334 = scalar_lea.sflag [#allocation4], 1
    %335 = vsyncpa %s334, 1

</llo_original>
